<compile_context>
chip_gen: v5e
topology: v5e:2x2
jax: 0.10.0
libtpu: 0.0.40
codegen_flags: <defaults>
</compile_context>

<pallas_src>
import jax
import jax.numpy as jnp
from jax.experimental import pallas as pl
from jax.experimental.pallas import tpu as pltpu


def _round_up(x: int, m: int) -> int:
    return (x + m - 1) // m * m


def _pooled_logreg_kernel(prem_ref, hypo_ref, emb_ref, w_ref, b_ref, out_ref):
    """
    prem_ref : (T, L_p) int32  token ids (one batch tile)
    hypo_ref : (T, L_h) int32  token ids
    emb_ref  : (V, E)   f32    embedding table (constant block -> loaded once)
    w_ref    : (2, E)   f32    row 0 = premise weights, row 1 = hypothesis weights
    b_ref    : (1,)     f32    bias (SMEM scalar)
    out_ref  : (T, 1)   f32    sigmoid(logit)
    """
    V, E = emb_ref.shape
    emb = emb_ref[...]                                              # (V, E)
    vocab_iota = jax.lax.broadcasted_iota(jnp.int32, (1, V), 1)     # (1, V)

    def pooled_weighted(ids_ref, w_row):
        # embedding gather fused with max-pool over the sequence axis.
        ids = ids_ref[...]                                          # (T, L) int32
        L = ids.shape[1]
        pooled = None
        for l in range(L):                                          # L small & static -> unrolled
            tok = ids[:, l:l + 1]                                   # (T, 1)
            onehot = (tok == vocab_iota).astype(jnp.float32)        # (T, V)
            rows = jnp.dot(onehot, emb,
                           preferred_element_type=jnp.float32)      # (T, E) == emb[tok]
            pooled = rows if pooled is None else jnp.maximum(pooled, rows)
        # (T, E) * (1, E) -> lane reduce -> (T, 1)   (VPU + XLU, no 1-wide MXU matvec)
        return jnp.sum(pooled * w_row, axis=-1, keepdims=True)

    w_p = w_ref[0:1, :]                                             # (1, E)
    w_h = w_ref[1:2, :]                                             # (1, E)
    logits = pooled_weighted(prem_ref, w_p) + pooled_weighted(hypo_ref, w_h) + b_ref[0]
    out_ref[...] = jax.nn.sigmoid(logits)


def pooled_logistic_regression(premise, hypothesis, emb_table, w, b, *, tile_n=512):
    """
    premise    : (N, L_p) int32
    hypothesis : (N, L_h) int32
    emb_table  : (V, E)   float32
    w          : (1, 2E)  float32   (PyTorch nn.Linear weight layout)
    b          : (1,)     float32
    returns    : (N,)     float32
    """
    N, L_p = premise.shape
    _, L_h = hypothesis.shape
    V, E = emb_table.shape

    premise = premise.astype(jnp.int32)
    hypothesis = hypothesis.astype(jnp.int32)
    emb_table = emb_table.astype(jnp.float32)
    w2 = w.reshape(2, E).astype(jnp.float32)          # [w_premise ; w_hypothesis]
    b1 = b.reshape(1).astype(jnp.float32)

    # Batch tile: multiple of 8 sublanes; capped at 512 rows (≈85% of HBM roofline
    # per measured data) which also fits v7x's smaller 64 MiB VMEM with headroom.
    tile_n = min(tile_n, _round_up(N, 8))
    n_pad = _round_up(N, tile_n)
    if n_pad != N:  # pad with token 0 so every grid block is full; padded rows are sliced off.
        premise = jnp.pad(premise, ((0, n_pad - N), (0, 0)))
        hypothesis = jnp.pad(hypothesis, ((0, n_pad - N), (0, 0)))
    grid = (n_pad // tile_n,)

    cost = pl.CostEstimate(
        flops=2 * N * (L_p + L_h) * V * E + 4 * N * E,
        transcendentals=N,
        bytes_accessed=4 * (N * (L_p + L_h) + V * E + 2 * E + 1 + N),
    )

    out = pl.pallas_call(
        _pooled_logreg_kernel,
        out_shape=jax.ShapeDtypeStruct((n_pad, 1), jnp.float32),
        grid=grid,
        in_specs=[
            pl.BlockSpec((tile_n, L_p), lambda i: (i, 0)),      # premise ids (tiled over N)
            pl.BlockSpec((tile_n, L_h), lambda i: (i, 0)),      # hypothesis ids (tiled over N)
            pl.BlockSpec((V, E), lambda i: (0, 0)),             # emb table: constant block, VMEM-resident
            pl.BlockSpec((2, E), lambda i: (0, 0)),             # linear weight
            pl.BlockSpec(memory_space=pltpu.MemorySpace.SMEM),  # bias scalar in SMEM
        ],
        out_specs=pl.BlockSpec((tile_n, 1), lambda i: (i, 0)),
        compiler_params=pltpu.CompilerParams(
            dimension_semantics=("parallel",),                  # shard batch tiles across TCs (v7x)
            vmem_limit_bytes=32 * 1024 * 1024,
        ),
        cost_estimate=cost,
    )(premise, hypothesis, emb_table, w2, b1)

    # PyTorch: torch.squeeze((N, 1)) -> (N,)
    return out[:N, 0]


def _reference(premise, hypothesis, emb_table, w, b):
    prem = jnp.max(jnp.take(emb_table, premise, axis=0), axis=1)
    hypo = jnp.max(jnp.take(emb_table, hypothesis, axis=0), axis=1)
    concat = jnp.concatenate([prem, hypo], axis=1)
    logits = concat @ w.T + b
    return jax.nn.sigmoid(logits).reshape(-1)


if __name__ == "__main__":
    key = jax.random.PRNGKey(0)
    k_emb, k_w, k_b, k_p, k_h = jax.random.split(key, 5)

    N, L_p, L_h = 2, 8, 8
    V, E = 50, 32

    # Deterministic synthetic parameters (shapes match nn.Embedding(V, E) / nn.Linear(2E, 1)).
    emb_table = jax.random.normal(k_emb, (V, E), dtype=jnp.float32)
    bound = 1.0 / (2 * E) ** 0.5
    w = jax.random.uniform(k_w, (1, 2 * E), minval=-bound, maxval=bound, dtype=jnp.float32)
    b = jax.random.uniform(k_b, (1,), minval=-bound, maxval=bound, dtype=jnp.float32)

    premise = jax.random.randint(k_p, (N, L_p), 0, V, dtype=jnp.int32)
    hypothesis = jax.random.randint(k_h, (N, L_h), 0, V, dtype=jnp.int32)

    out = pooled_logistic_regression(premise, hypothesis, emb_table, w, b)
    out = jax.block_until_ready(out)

    ref = _reference(premise, hypothesis, emb_table, w, b)
    assert out.shape == (N,)
    assert jnp.allclose(out, ref, atol=1e-5, rtol=1e-5)

    print("KERNEL_OK")
</pallas_src>

<mosaic_0001>
module attributes {stable_mosaic.version = 11 : i64} {
  func.func @_pooled_logreg_kernel(%arg0: i32, %arg1: memref<8x8xi32, #tpu.memory_space<vmem>>, %arg2: memref<8x8xi32, #tpu.memory_space<vmem>>, %arg3: memref<50x32xf32, #tpu.memory_space<vmem>>, %arg4: memref<2x32xf32, #tpu.memory_space<vmem>>, %arg5: memref<1xf32, #tpu.memory_space<smem>>, %arg6: memref<8x1xf32, #tpu.memory_space<vmem>>) attributes {dimension_semantics = [#tpu.dimension_semantics<parallel>], iteration_bounds = array<i64: 1>, scalar_prefetch = 0 : i64, scratch_operands = 0 : i64, tpu.core_type = #tpu.core_type<tc>, window_params = [{transform_indices = @transform_0, window_bounds = array<i64: 8, 8>}, {transform_indices = @transform_1, window_bounds = array<i64: 8, 8>}, {pipeline_mode = #tpu.pipeline_mode<synchronous>, transform_indices = @transform_2, window_bounds = array<i64: 50, 32>}, {pipeline_mode = #tpu.pipeline_mode<synchronous>, transform_indices = @transform_3, window_bounds = array<i64: 2, 32>}, {transform_indices = @transform_4, window_bounds = array<i64: 1>}, {transform_indices = @transform_5, window_bounds = array<i64: 8, 1>}]} {
    %c0 = arith.constant 0 : index
    %c0_0 = arith.constant 0 : index
    %0 = vector.load %arg3[%c0, %c0_0] : memref<50x32xf32, #tpu.memory_space<vmem>>, vector<50x32xf32>
    %1 = tpu.iota {dimensions = array<i32: 1>} : vector<1x50xi32>
    %c0_1 = arith.constant 0 : index
    %c0_2 = arith.constant 0 : index
    %2 = vector.load %arg4[%c0_1, %c0_2] : memref<2x32xf32, #tpu.memory_space<vmem>>, vector<1x32xf32>
    %c1 = arith.constant 1 : index
    %c0_3 = arith.constant 0 : index
    %3 = vector.load %arg4[%c1, %c0_3] : memref<2x32xf32, #tpu.memory_space<vmem>>, vector<1x32xf32>
    %c0_4 = arith.constant 0 : index
    %c0_5 = arith.constant 0 : index
    %4 = vector.load %arg1[%c0_4, %c0_5] : memref<8x8xi32, #tpu.memory_space<vmem>>, vector<8x8xi32>
    %5 = vector.extract_strided_slice %4 {offsets = [0, 0], sizes = [8, 1], strides = [1, 1]} : vector<8x8xi32> to vector<8x1xi32>
    %6 = vector.broadcast %5 : vector<8x1xi32> to vector<8x50xi32>
    %7 = vector.broadcast %1 : vector<1x50xi32> to vector<8x50xi32>
    %8 = arith.cmpi eq, %6, %7 : vector<8x50xi32>
    %9 = arith.extui %8 : vector<8x50xi1> to vector<8x50xi32>
    %10 = arith.sitofp %9 : vector<8x50xi32> to vector<8x50xf32>
    %cst = arith.constant dense<0.000000e+00> : vector<8x32xf32>
    %11 = tpu.matmul %10, %0, %cst {dimension_numbers = #tpu.dot_dimension_numbers<[1], [0], [0], [1], [0, 0, 1, 1], [], []>} : vector<8x50xf32>, vector<50x32xf32>, vector<8x32xf32> -> vector<8x32xf32>
    %12 = vector.extract_strided_slice %4 {offsets = [0, 1], sizes = [8, 1], strides = [1, 1]} : vector<8x8xi32> to vector<8x1xi32>
    %13 = vector.broadcast %12 : vector<8x1xi32> to vector<8x50xi32>
    %14 = vector.broadcast %1 : vector<1x50xi32> to vector<8x50xi32>
    %15 = arith.cmpi eq, %13, %14 : vector<8x50xi32>
    %16 = arith.extui %15 : vector<8x50xi1> to vector<8x50xi32>
    %17 = arith.sitofp %16 : vector<8x50xi32> to vector<8x50xf32>
    %cst_6 = arith.constant dense<0.000000e+00> : vector<8x32xf32>
    %18 = tpu.matmul %17, %0, %cst_6 {dimension_numbers = #tpu.dot_dimension_numbers<[1], [0], [0], [1], [0, 0, 1, 1], [], []>} : vector<8x50xf32>, vector<50x32xf32>, vector<8x32xf32> -> vector<8x32xf32>
    %19 = arith.maximumf %11, %18 : vector<8x32xf32>
    %20 = vector.extract_strided_slice %4 {offsets = [0, 2], sizes = [8, 1], strides = [1, 1]} : vector<8x8xi32> to vector<8x1xi32>
    %21 = vector.broadcast %20 : vector<8x1xi32> to vector<8x50xi32>
    %22 = vector.broadcast %1 : vector<1x50xi32> to vector<8x50xi32>
    %23 = arith.cmpi eq, %21, %22 : vector<8x50xi32>
    %24 = arith.extui %23 : vector<8x50xi1> to vector<8x50xi32>
    %25 = arith.sitofp %24 : vector<8x50xi32> to vector<8x50xf32>
    %cst_7 = arith.constant dense<0.000000e+00> : vector<8x32xf32>
    %26 = tpu.matmul %25, %0, %cst_7 {dimension_numbers = #tpu.dot_dimension_numbers<[1], [0], [0], [1], [0, 0, 1, 1], [], []>} : vector<8x50xf32>, vector<50x32xf32>, vector<8x32xf32> -> vector<8x32xf32>
    %27 = arith.maximumf %19, %26 : vector<8x32xf32>
    %28 = vector.extract_strided_slice %4 {offsets = [0, 3], sizes = [8, 1], strides = [1, 1]} : vector<8x8xi32> to vector<8x1xi32>
    %29 = vector.broadcast %28 : vector<8x1xi32> to vector<8x50xi32>
    %30 = vector.broadcast %1 : vector<1x50xi32> to vector<8x50xi32>
    %31 = arith.cmpi eq, %29, %30 : vector<8x50xi32>
    %32 = arith.extui %31 : vector<8x50xi1> to vector<8x50xi32>
    %33 = arith.sitofp %32 : vector<8x50xi32> to vector<8x50xf32>
    %cst_8 = arith.constant dense<0.000000e+00> : vector<8x32xf32>
    %34 = tpu.matmul %33, %0, %cst_8 {dimension_numbers = #tpu.dot_dimension_numbers<[1], [0], [0], [1], [0, 0, 1, 1], [], []>} : vector<8x50xf32>, vector<50x32xf32>, vector<8x32xf32> -> vector<8x32xf32>
    %35 = arith.maximumf %27, %34 : vector<8x32xf32>
    %36 = vector.extract_strided_slice %4 {offsets = [0, 4], sizes = [8, 1], strides = [1, 1]} : vector<8x8xi32> to vector<8x1xi32>
    %37 = vector.broadcast %36 : vector<8x1xi32> to vector<8x50xi32>
    %38 = vector.broadcast %1 : vector<1x50xi32> to vector<8x50xi32>
    %39 = arith.cmpi eq, %37, %38 : vector<8x50xi32>
    %40 = arith.extui %39 : vector<8x50xi1> to vector<8x50xi32>
    %41 = arith.sitofp %40 : vector<8x50xi32> to vector<8x50xf32>
    %cst_9 = arith.constant dense<0.000000e+00> : vector<8x32xf32>
    %42 = tpu.matmul %41, %0, %cst_9 {dimension_numbers = #tpu.dot_dimension_numbers<[1], [0], [0], [1], [0, 0, 1, 1], [], []>} : vector<8x50xf32>, vector<50x32xf32>, vector<8x32xf32> -> vector<8x32xf32>
    %43 = arith.maximumf %35, %42 : vector<8x32xf32>
    %44 = vector.extract_strided_slice %4 {offsets = [0, 5], sizes = [8, 1], strides = [1, 1]} : vector<8x8xi32> to vector<8x1xi32>
    %45 = vector.broadcast %44 : vector<8x1xi32> to vector<8x50xi32>
    %46 = vector.broadcast %1 : vector<1x50xi32> to vector<8x50xi32>
    %47 = arith.cmpi eq, %45, %46 : vector<8x50xi32>
    %48 = arith.extui %47 : vector<8x50xi1> to vector<8x50xi32>
    %49 = arith.sitofp %48 : vector<8x50xi32> to vector<8x50xf32>
    %cst_10 = arith.constant dense<0.000000e+00> : vector<8x32xf32>
    %50 = tpu.matmul %49, %0, %cst_10 {dimension_numbers = #tpu.dot_dimension_numbers<[1], [0], [0], [1], [0, 0, 1, 1], [], []>} : vector<8x50xf32>, vector<50x32xf32>, vector<8x32xf32> -> vector<8x32xf32>
    %51 = arith.maximumf %43, %50 : vector<8x32xf32>
    %52 = vector.extract_strided_slice %4 {offsets = [0, 6], sizes = [8, 1], strides = [1, 1]} : vector<8x8xi32> to vector<8x1xi32>
    %53 = vector.broadcast %52 : vector<8x1xi32> to vector<8x50xi32>
    %54 = vector.broadcast %1 : vector<1x50xi32> to vector<8x50xi32>
    %55 = arith.cmpi eq, %53, %54 : vector<8x50xi32>
    %56 = arith.extui %55 : vector<8x50xi1> to vector<8x50xi32>
    %57 = arith.sitofp %56 : vector<8x50xi32> to vector<8x50xf32>
    %cst_11 = arith.constant dense<0.000000e+00> : vector<8x32xf32>
    %58 = tpu.matmul %57, %0, %cst_11 {dimension_numbers = #tpu.dot_dimension_numbers<[1], [0], [0], [1], [0, 0, 1, 1], [], []>} : vector<8x50xf32>, vector<50x32xf32>, vector<8x32xf32> -> vector<8x32xf32>
    %59 = arith.maximumf %51, %58 : vector<8x32xf32>
    %60 = vector.extract_strided_slice %4 {offsets = [0, 7], sizes = [8, 1], strides = [1, 1]} : vector<8x8xi32> to vector<8x1xi32>
    %61 = vector.broadcast %60 : vector<8x1xi32> to vector<8x50xi32>
    %62 = vector.broadcast %1 : vector<1x50xi32> to vector<8x50xi32>
    %63 = arith.cmpi eq, %61, %62 : vector<8x50xi32>
    %64 = arith.extui %63 : vector<8x50xi1> to vector<8x50xi32>
    %65 = arith.sitofp %64 : vector<8x50xi32> to vector<8x50xf32>
    %cst_12 = arith.constant dense<0.000000e+00> : vector<8x32xf32>
    %66 = tpu.matmul %65, %0, %cst_12 {dimension_numbers = #tpu.dot_dimension_numbers<[1], [0], [0], [1], [0, 0, 1, 1], [], []>} : vector<8x50xf32>, vector<50x32xf32>, vector<8x32xf32> -> vector<8x32xf32>
    %67 = arith.maximumf %59, %66 : vector<8x32xf32>
    %68 = vector.broadcast %2 : vector<1x32xf32> to vector<8x32xf32>
    %69 = arith.mulf %67, %68 : vector<8x32xf32>
    %cst_13 = arith.constant dense<0.000000e+00> : vector<8xf32>
    %70 = vector.multi_reduction <add>, %69, %cst_13 [1] : vector<8x32xf32> to vector<8xf32>
    %71 = vector.shape_cast %70 : vector<8xf32> to vector<8x1xf32>
    %c0_14 = arith.constant 0 : index
    %c0_15 = arith.constant 0 : index
    %72 = vector.load %arg2[%c0_14, %c0_15] : memref<8x8xi32, #tpu.memory_space<vmem>>, vector<8x8xi32>
    %73 = vector.extract_strided_slice %72 {offsets = [0, 0], sizes = [8, 1], strides = [1, 1]} : vector<8x8xi32> to vector<8x1xi32>
    %74 = vector.broadcast %73 : vector<8x1xi32> to vector<8x50xi32>
    %75 = vector.broadcast %1 : vector<1x50xi32> to vector<8x50xi32>
    %76 = arith.cmpi eq, %74, %75 : vector<8x50xi32>
    %77 = arith.extui %76 : vector<8x50xi1> to vector<8x50xi32>
    %78 = arith.sitofp %77 : vector<8x50xi32> to vector<8x50xf32>
    %cst_16 = arith.constant dense<0.000000e+00> : vector<8x32xf32>
    %79 = tpu.matmul %78, %0, %cst_16 {dimension_numbers = #tpu.dot_dimension_numbers<[1], [0], [0], [1], [0, 0, 1, 1], [], []>} : vector<8x50xf32>, vector<50x32xf32>, vector<8x32xf32> -> vector<8x32xf32>
    %80 = vector.extract_strided_slice %72 {offsets = [0, 1], sizes = [8, 1], strides = [1, 1]} : vector<8x8xi32> to vector<8x1xi32>
    %81 = vector.broadcast %80 : vector<8x1xi32> to vector<8x50xi32>
    %82 = vector.broadcast %1 : vector<1x50xi32> to vector<8x50xi32>
    %83 = arith.cmpi eq, %81, %82 : vector<8x50xi32>
    %84 = arith.extui %83 : vector<8x50xi1> to vector<8x50xi32>
    %85 = arith.sitofp %84 : vector<8x50xi32> to vector<8x50xf32>
    %cst_17 = arith.constant dense<0.000000e+00> : vector<8x32xf32>
    %86 = tpu.matmul %85, %0, %cst_17 {dimension_numbers = #tpu.dot_dimension_numbers<[1], [0], [0], [1], [0, 0, 1, 1], [], []>} : vector<8x50xf32>, vector<50x32xf32>, vector<8x32xf32> -> vector<8x32xf32>
    %87 = arith.maximumf %79, %86 : vector<8x32xf32>
    %88 = vector.extract_strided_slice %72 {offsets = [0, 2], sizes = [8, 1], strides = [1, 1]} : vector<8x8xi32> to vector<8x1xi32>
    %89 = vector.broadcast %88 : vector<8x1xi32> to vector<8x50xi32>
    %90 = vector.broadcast %1 : vector<1x50xi32> to vector<8x50xi32>
    %91 = arith.cmpi eq, %89, %90 : vector<8x50xi32>
    %92 = arith.extui %91 : vector<8x50xi1> to vector<8x50xi32>
    %93 = arith.sitofp %92 : vector<8x50xi32> to vector<8x50xf32>
    %cst_18 = arith.constant dense<0.000000e+00> : vector<8x32xf32>
    %94 = tpu.matmul %93, %0, %cst_18 {dimension_numbers = #tpu.dot_dimension_numbers<[1], [0], [0], [1], [0, 0, 1, 1], [], []>} : vector<8x50xf32>, vector<50x32xf32>, vector<8x32xf32> -> vector<8x32xf32>
    %95 = arith.maximumf %87, %94 : vector<8x32xf32>
    %96 = vector.extract_strided_slice %72 {offsets = [0, 3], sizes = [8, 1], strides = [1, 1]} : vector<8x8xi32> to vector<8x1xi32>
    %97 = vector.broadcast %96 : vector<8x1xi32> to vector<8x50xi32>
    %98 = vector.broadcast %1 : vector<1x50xi32> to vector<8x50xi32>
    %99 = arith.cmpi eq, %97, %98 : vector<8x50xi32>
    %100 = arith.extui %99 : vector<8x50xi1> to vector<8x50xi32>
    %101 = arith.sitofp %100 : vector<8x50xi32> to vector<8x50xf32>
    %cst_19 = arith.constant dense<0.000000e+00> : vector<8x32xf32>
    %102 = tpu.matmul %101, %0, %cst_19 {dimension_numbers = #tpu.dot_dimension_numbers<[1], [0], [0], [1], [0, 0, 1, 1], [], []>} : vector<8x50xf32>, vector<50x32xf32>, vector<8x32xf32> -> vector<8x32xf32>
    %103 = arith.maximumf %95, %102 : vector<8x32xf32>
    %104 = vector.extract_strided_slice %72 {offsets = [0, 4], sizes = [8, 1], strides = [1, 1]} : vector<8x8xi32> to vector<8x1xi32>
    %105 = vector.broadcast %104 : vector<8x1xi32> to vector<8x50xi32>
    %106 = vector.broadcast %1 : vector<1x50xi32> to vector<8x50xi32>
    %107 = arith.cmpi eq, %105, %106 : vector<8x50xi32>
    %108 = arith.extui %107 : vector<8x50xi1> to vector<8x50xi32>
    %109 = arith.sitofp %108 : vector<8x50xi32> to vector<8x50xf32>
    %cst_20 = arith.constant dense<0.000000e+00> : vector<8x32xf32>
    %110 = tpu.matmul %109, %0, %cst_20 {dimension_numbers = #tpu.dot_dimension_numbers<[1], [0], [0], [1], [0, 0, 1, 1], [], []>} : vector<8x50xf32>, vector<50x32xf32>, vector<8x32xf32> -> vector<8x32xf32>
    %111 = arith.maximumf %103, %110 : vector<8x32xf32>
    %112 = vector.extract_strided_slice %72 {offsets = [0, 5], sizes = [8, 1], strides = [1, 1]} : vector<8x8xi32> to vector<8x1xi32>
    %113 = vector.broadcast %112 : vector<8x1xi32> to vector<8x50xi32>
    %114 = vector.broadcast %1 : vector<1x50xi32> to vector<8x50xi32>
    %115 = arith.cmpi eq, %113, %114 : vector<8x50xi32>
    %116 = arith.extui %115 : vector<8x50xi1> to vector<8x50xi32>
    %117 = arith.sitofp %116 : vector<8x50xi32> to vector<8x50xf32>
    %cst_21 = arith.constant dense<0.000000e+00> : vector<8x32xf32>
    %118 = tpu.matmul %117, %0, %cst_21 {dimension_numbers = #tpu.dot_dimension_numbers<[1], [0], [0], [1], [0, 0, 1, 1], [], []>} : vector<8x50xf32>, vector<50x32xf32>, vector<8x32xf32> -> vector<8x32xf32>
    %119 = arith.maximumf %111, %118 : vector<8x32xf32>
    %120 = vector.extract_strided_slice %72 {offsets = [0, 6], sizes = [8, 1], strides = [1, 1]} : vector<8x8xi32> to vector<8x1xi32>
    %121 = vector.broadcast %120 : vector<8x1xi32> to vector<8x50xi32>
    %122 = vector.broadcast %1 : vector<1x50xi32> to vector<8x50xi32>
    %123 = arith.cmpi eq, %121, %122 : vector<8x50xi32>
    %124 = arith.extui %123 : vector<8x50xi1> to vector<8x50xi32>
    %125 = arith.sitofp %124 : vector<8x50xi32> to vector<8x50xf32>
    %cst_22 = arith.constant dense<0.000000e+00> : vector<8x32xf32>
    %126 = tpu.matmul %125, %0, %cst_22 {dimension_numbers = #tpu.dot_dimension_numbers<[1], [0], [0], [1], [0, 0, 1, 1], [], []>} : vector<8x50xf32>, vector<50x32xf32>, vector<8x32xf32> -> vector<8x32xf32>
    %127 = arith.maximumf %119, %126 : vector<8x32xf32>
    %128 = vector.extract_strided_slice %72 {offsets = [0, 7], sizes = [8, 1], strides = [1, 1]} : vector<8x8xi32> to vector<8x1xi32>
    %129 = vector.broadcast %128 : vector<8x1xi32> to vector<8x50xi32>
    %130 = vector.broadcast %1 : vector<1x50xi32> to vector<8x50xi32>
    %131 = arith.cmpi eq, %129, %130 : vector<8x50xi32>
    %132 = arith.extui %131 : vector<8x50xi1> to vector<8x50xi32>
    %133 = arith.sitofp %132 : vector<8x50xi32> to vector<8x50xf32>
    %cst_23 = arith.constant dense<0.000000e+00> : vector<8x32xf32>
    %134 = tpu.matmul %133, %0, %cst_23 {dimension_numbers = #tpu.dot_dimension_numbers<[1], [0], [0], [1], [0, 0, 1, 1], [], []>} : vector<8x50xf32>, vector<50x32xf32>, vector<8x32xf32> -> vector<8x32xf32>
    %135 = arith.maximumf %127, %134 : vector<8x32xf32>
    %136 = vector.broadcast %3 : vector<1x32xf32> to vector<8x32xf32>
    %137 = arith.mulf %135, %136 : vector<8x32xf32>
    %cst_24 = arith.constant dense<0.000000e+00> : vector<8xf32>
    %138 = vector.multi_reduction <add>, %137, %cst_24 [1] : vector<8x32xf32> to vector<8xf32>
    %139 = vector.shape_cast %138 : vector<8xf32> to vector<8x1xf32>
    %140 = arith.addf %71, %139 : vector<8x1xf32>
    %c0_25 = arith.constant 0 : index
    %141 = memref.load %arg5[%c0_25] : memref<1xf32, #tpu.memory_space<smem>>
    %142 = vector.broadcast %141 : f32 to vector<8x1xf32>
    %143 = arith.addf %140, %142 : vector<8x1xf32>
    %144 = arith.negf %143 : vector<8x1xf32>
    %145 = math.exp %144 : vector<8x1xf32>
    %cst_26 = arith.constant 1.000000e+00 : f32
    %146 = vector.broadcast %cst_26 : f32 to vector<8x1xf32>
    %147 = arith.addf %146, %145 : vector<8x1xf32>
    %148 = arith.divf %146, %147 : vector<8x1xf32>
    %c0_27 = arith.constant 0 : index
    %c0_28 = arith.constant 0 : index
    %149 = vector.load %arg6[%c0_27, %c0_28] : memref<8x1xf32, #tpu.memory_space<vmem>>, vector<8x1xf32>
    tpu.vector_store %arg6[%c0_27, %c0_28], %148 {strides = array<i32>} : memref<8x1xf32, #tpu.memory_space<vmem>>, vector<8x1xf32>,
    return
  }
  func.func @transform_0(%arg0: i32) -> (i32, i32) {
    %c0_i32 = arith.constant 0 : i32
    %c0_i32_0 = arith.constant 0 : i32
    return %arg0, %c0_i32 : i32, i32
  }
  func.func @transform_1(%arg0: i32) -> (i32, i32) {
    %c0_i32 = arith.constant 0 : i32
    %c0_i32_0 = arith.constant 0 : i32
    return %arg0, %c0_i32 : i32, i32
  }
  func.func @transform_2(%arg0: i32) -> (i32, i32) {
    %c0_i32 = arith.constant 0 : i32
    %c0_i32_0 = arith.constant 0 : i32
    %c0_i32_1 = arith.constant 0 : i32
    return %c0_i32, %c0_i32_0 : i32, i32
  }
  func.func @transform_3(%arg0: i32) -> (i32, i32) {
    %c0_i32 = arith.constant 0 : i32
    %c0_i32_0 = arith.constant 0 : i32
    %c0_i32_1 = arith.constant 0 : i32
    return %c0_i32, %c0_i32_0 : i32, i32
  }
  func.func @transform_4(%arg0: i32) -> i32 {
    %c0_i32 = arith.constant 0 : i32
    %c0_i32_0 = arith.constant 0 : i32
    return %c0_i32 : i32
  }
  func.func @transform_5(%arg0: i32) -> (i32, i32) {
    %c0_i32 = arith.constant 0 : i32
    %c0_i32_0 = arith.constant 0 : i32
    return %arg0, %c0_i32 : i32, i32
  }
}

</mosaic_0001>

<llo_original>
// kernel: tpu_custom_call.1
$region0: #{tpu_custom_call.1}
  #allocation0 [shape = 'u32[]', space=smem, size = 0x4, offset = 0x4, fixed_abs, tag = 'smem constant byte address 0x4 - core index']
  #allocation1 [shape = 'u32[72,128]{1,0:T(1,128)}', space=vmem, size = 0x9000, scoped, tag = 'internal scratch']
  #allocation2 [shape = 'f32[1]{0:T(128)S(6)}', space=smem, size = 0x200, scoped, tag = 'scoped memory for tpu_custom_call.1']
  %s0 = inlined_call_operand.vmem [shape: s32[8,8], index: 0, kind: input, shape index: {}]
  %s1 = inlined_call_operand.vmem [shape: s32[8,8], index: 1, kind: input, shape index: {}]
  %s2 = inlined_call_operand.vmem [shape: f32[50,32], index: 2, kind: input, shape index: {}]
  %s3 = inlined_call_operand.vmem [shape: f32[2,32], index: 3, kind: input, shape index: {}]
  %s4 = inlined_call_operand.<no memory space> [shape: f32[1], index: 4, kind: input, shape index: {}]
  %s5 = inlined_call_operand.vmem [shape: f32[8,1], index: 5, kind: output, shape index: {}]
  %s6 = sld [smem:[#allocation0]]
  $region30: #{tpu_custom_call.1} parent=0
    _
  %s8 = ssub.s32 1, %s6
  %s9 = scalar_select 0, %s8, %s6
  %10 = sst [smem:[#allocation2]] %s4
  // Predicated region
  $region2: #{tpu_custom_call.1} parent=0 // pred_check
    _
  $region3: #{tpu_custom_call.1} parent=0 // pred_check_branch
    %12 = sbr.rel (0) target = $region5
  $region4: #{tpu_custom_call.1} parent=0 // pred_region
    _
  $region5: #{tpu_custom_call.1} parent=0 // pred_fallthru
    _
  // Predicated region
  $region6: #{tpu_custom_call.1} parent=0 // pred_check
    _
  $region7: #{tpu_custom_call.1} parent=0 // pred_check_branch
    %14 = sbr.rel (0) target = $region9
  $region8: #{tpu_custom_call.1} parent=0 // pred_region
    _
  $region9: #{tpu_custom_call.1} parent=0 // pred_fallthru
    _
  // Predicated region
  $region10: #{tpu_custom_call.1} parent=0 // pred_check
    _
  $region11: #{tpu_custom_call.1} parent=0 // pred_check_branch
    %16 = sbr.rel (0) target = $region13
  $region12: #{tpu_custom_call.1} parent=0 // pred_region
    _
  $region13: #{tpu_custom_call.1} parent=0 // pred_fallthru
    _
  // Predicated region
  $region14: #{tpu_custom_call.1} parent=0 // pred_check
    _
  $region15: #{tpu_custom_call.1} parent=0 // pred_check_branch
    %18 = sbr.rel (0) target = $region17
  $region16: #{tpu_custom_call.1} parent=0 // pred_region
    _
  $region17: #{tpu_custom_call.1} parent=0 // pred_fallthru
    _
  // Predicated region
  $region18: #{tpu_custom_call.1} parent=0 // pred_check
    _
  $region19: #{tpu_custom_call.1} parent=0 // pred_check_branch
    %20 = sbr.rel (0) target = $region21
  $region20: #{tpu_custom_call.1} parent=0 // pred_region
    _
  $region21: #{tpu_custom_call.1} parent=0 // pred_fallthru
    _
  %v21 = vld [vmem:[%s2] sm:$0xff]
  %v22 = vld [vmem:[%s2 + $0x8] sm:$0xff]
  %v23 = vld [vmem:[%s2 + $0x10] sm:$0xff]
  %v24 = vld [vmem:[%s2 + $0x18] sm:$0xff]
  %v25 = vld [vmem:[%s2 + $0x20] sm:$0xff]
  %v26 = vld [vmem:[%s2 + $0x28] sm:$0xff]
  %v27 = vld [vmem:[%s2 + $0x30] sm:$0x3]
  %v28 = vlaneseq
  %v29 = vand.u32 %v28, 127
  %v30 = vld [vmem:[%s3] sm:$0x1]
  %v31 = vld [vmem:[%s3 + $0x1] sm:$0x1]
  %v32 = vld [vmem:[%s0] sm:$0xff]
  %33 = vset.pattern.permute.xlu0 0
  %34 = vperm.xlu0 %33, %v32
  %v35 = vpop.permute.xlu0 %34
  %vm36 = vcmp.eq.s32.totalorder %v35, %v29
  %v37 = vsel %vm36, 1, 0
  %v38 = vcvt.s32.f32 %v37
  %vm39 = vcmask 408576
  %v41 = vsel %vm39, %v38, 0
  %vm43 = vcmask 1041408
  %v45 = vsel %vm43, %v27, 0
  %47 = vmatpush.msra.mxu0 0.0
  %48 = vmatpush.msra.mxu0 0.0
  %49 = vmatpush.msra.mxu0 0.0
  %50 = vmatpush.msra.mxu0 0.0
  %51 = vmatpush.msra.mxu0 0.0
  %52 = vmatpush.msra.mxu0 0.0
  %53 = vmatpush.msra.mxu0 0.0
  %54 = vmatpush.msra.mxu0 0.0
  %55 = vmatpush.msra.mxu0 0.0
  %56 = vmatpush.msra.mxu0 %v45
  %57 = vmatpush.msra.mxu0 %v26
  %58 = vmatpush.msra.mxu0 %v25
  %59 = vmatpush.msra.mxu0 %v24
  %60 = vmatpush.msra.mxu0 %v23
  %61 = vmatpush.msra.mxu0 %v22
  %62 = vmatpush.msra.mxu0 %v21
  %63 = vmatmul.f32.gmra.mxu0 %v41
  %v64 = vpop.f32.mrf.mxu0
  %v65 = vadd.f32 0.0, %v64
  %66 = vdwg.mxu0
  %67 = vset.pattern.permute.xlu0 1
  %68 = vperm.xlu0 %67, %v32
  %v69 = vpop.permute.xlu0 %68
  %vm70 = vcmp.eq.s32.totalorder %v69, %v29
  %v71 = vsel %vm70, 1, 0
  %v72 = vcvt.s32.f32 %v71
  %v74 = vsel %vm39, %v72, 0
  %76 = vmatpush.msra.mxu0 0.0
  %77 = vmatpush.msra.mxu0 0.0
  %78 = vmatpush.msra.mxu0 0.0
  %79 = vmatpush.msra.mxu0 0.0
  %80 = vmatpush.msra.mxu0 0.0
  %81 = vmatpush.msra.mxu0 0.0
  %82 = vmatpush.msra.mxu0 0.0
  %83 = vmatpush.msra.mxu0 0.0
  %84 = vmatpush.msra.mxu0 0.0
  %85 = vmatpush.msra.mxu0 %v45
  %86 = vmatpush.msra.mxu0 %v26
  %87 = vmatpush.msra.mxu0 %v25
  %88 = vmatpush.msra.mxu0 %v24
  %89 = vmatpush.msra.mxu0 %v23
  %90 = vmatpush.msra.mxu0 %v22
  %91 = vmatpush.msra.mxu0 %v21
  %92 = vmatmul.f32.gmra.mxu0 %v74
  %v93 = vpop.f32.mrf.mxu0
  %v94 = vadd.f32 0.0, %v93
  %95 = vdwg.mxu0
  %v96 = vmax.f32 %v65, %v94
  %97 = vset.pattern.permute.xlu0 2
  %98 = vperm.xlu0 %97, %v32
  %v99 = vpop.permute.xlu0 %98
  %vm100 = vcmp.eq.s32.totalorder %v99, %v29
  %v101 = vsel %vm100, 1, 0
  %v102 = vcvt.s32.f32 %v101
  %v104 = vsel %vm39, %v102, 0
  %106 = vmatpush.msra.mxu0 0.0
  %107 = vmatpush.msra.mxu0 0.0
  %108 = vmatpush.msra.mxu0 0.0
  %109 = vmatpush.msra.mxu0 0.0
  %110 = vmatpush.msra.mxu0 0.0
  %111 = vmatpush.msra.mxu0 0.0
  %112 = vmatpush.msra.mxu0 0.0
  %113 = vmatpush.msra.mxu0 0.0
  %114 = vmatpush.msra.mxu0 0.0
  %115 = vmatpush.msra.mxu0 %v45
  %116 = vmatpush.msra.mxu0 %v26
  %117 = vmatpush.msra.mxu0 %v25
  %118 = vmatpush.msra.mxu0 %v24
  %119 = vmatpush.msra.mxu0 %v23
  %120 = vmatpush.msra.mxu0 %v22
  %121 = vmatpush.msra.mxu0 %v21
  %122 = vmatmul.f32.gmra.mxu0 %v104
  %v123 = vpop.f32.mrf.mxu0
  %v124 = vadd.f32 0.0, %v123
  %125 = vdwg.mxu0
  %v126 = vmax.f32 %v96, %v124
  %127 = vset.pattern.permute.xlu0 3
  %128 = vperm.xlu0 %127, %v32
  %v129 = vpop.permute.xlu0 %128
  %vm130 = vcmp.eq.s32.totalorder %v129, %v29
  %v131 = vsel %vm130, 1, 0
  %v132 = vcvt.s32.f32 %v131
  %v134 = vsel %vm39, %v132, 0
  %136 = vmatpush.msra.mxu0 0.0
  %137 = vmatpush.msra.mxu0 0.0
  %138 = vmatpush.msra.mxu0 0.0
  %139 = vmatpush.msra.mxu0 0.0
  %140 = vmatpush.msra.mxu0 0.0
  %141 = vmatpush.msra.mxu0 0.0
  %142 = vmatpush.msra.mxu0 0.0
  %143 = vmatpush.msra.mxu0 0.0
  %144 = vmatpush.msra.mxu0 0.0
  %145 = vmatpush.msra.mxu0 %v45
  %146 = vmatpush.msra.mxu0 %v26
  %147 = vmatpush.msra.mxu0 %v25
  %148 = vmatpush.msra.mxu0 %v24
  %149 = vmatpush.msra.mxu0 %v23
  %150 = vmatpush.msra.mxu0 %v22
  %151 = vmatpush.msra.mxu0 %v21
  %152 = vmatmul.f32.gmra.mxu0 %v134
  %v153 = vpop.f32.mrf.mxu0
  %v154 = vadd.f32 0.0, %v153
  %155 = vdwg.mxu0
  %v156 = vmax.f32 %v126, %v154
  %157 = vset.pattern.permute.xlu0 4
  %158 = vperm.xlu0 %157, %v32
  %v159 = vpop.permute.xlu0 %158
  %vm160 = vcmp.eq.s32.totalorder %v159, %v29
  %v161 = vsel %vm160, 1, 0
  %v162 = vcvt.s32.f32 %v161
  %v164 = vsel %vm39, %v162, 0
  %166 = vmatpush.msra.mxu0 0.0
  %167 = vmatpush.msra.mxu0 0.0
  %168 = vmatpush.msra.mxu0 0.0
  %169 = vmatpush.msra.mxu0 0.0
  %170 = vmatpush.msra.mxu0 0.0
  %171 = vmatpush.msra.mxu0 0.0
  %172 = vmatpush.msra.mxu0 0.0
  %173 = vmatpush.msra.mxu0 0.0
  %174 = vmatpush.msra.mxu0 0.0
  %175 = vmatpush.msra.mxu0 %v45
  %176 = vmatpush.msra.mxu0 %v26
  %177 = vmatpush.msra.mxu0 %v25
  %178 = vmatpush.msra.mxu0 %v24
  %179 = vmatpush.msra.mxu0 %v23
  %180 = vmatpush.msra.mxu0 %v22
  %181 = vmatpush.msra.mxu0 %v21
  %182 = vmatmul.f32.gmra.mxu0 %v164
  %v183 = vpop.f32.mrf.mxu0
  %v184 = vadd.f32 0.0, %v183
  %185 = vdwg.mxu0
  %v186 = vmax.f32 %v156, %v184
  %187 = vset.pattern.permute.xlu0 5
  %188 = vperm.xlu0 %187, %v32
  %v189 = vpop.permute.xlu0 %188
  %vm190 = vcmp.eq.s32.totalorder %v189, %v29
  %v191 = vsel %vm190, 1, 0
  %v192 = vcvt.s32.f32 %v191
  %v194 = vsel %vm39, %v192, 0
  %196 = vmatpush.msra.mxu0 0.0
  %197 = vmatpush.msra.mxu0 0.0
  %198 = vmatpush.msra.mxu0 0.0
  %199 = vmatpush.msra.mxu0 0.0
  %200 = vmatpush.msra.mxu0 0.0
  %201 = vmatpush.msra.mxu0 0.0
  %202 = vmatpush.msra.mxu0 0.0
  %203 = vmatpush.msra.mxu0 0.0
  %204 = vmatpush.msra.mxu0 0.0
  %205 = vmatpush.msra.mxu0 %v45
  %206 = vmatpush.msra.mxu0 %v26
  %207 = vmatpush.msra.mxu0 %v25
  %208 = vmatpush.msra.mxu0 %v24
  %209 = vmatpush.msra.mxu0 %v23
  %210 = vmatpush.msra.mxu0 %v22
  %211 = vmatpush.msra.mxu0 %v21
  %212 = vmatmul.f32.gmra.mxu0 %v194
  %v213 = vpop.f32.mrf.mxu0
  %v214 = vadd.f32 0.0, %v213
  %215 = vdwg.mxu0
  %v216 = vmax.f32 %v186, %v214
  %217 = vset.pattern.permute.xlu0 6
  %218 = vperm.xlu0 %217, %v32
  %v219 = vpop.permute.xlu0 %218
  %vm220 = vcmp.eq.s32.totalorder %v219, %v29
  %v221 = vsel %vm220, 1, 0
  %v222 = vcvt.s32.f32 %v221
  %v224 = vsel %vm39, %v222, 0
  %226 = vmatpush.msra.mxu0 0.0
  %227 = vmatpush.msra.mxu0 0.0
  %228 = vmatpush.msra.mxu0 0.0
  %229 = vmatpush.msra.mxu0 0.0
  %230 = vmatpush.msra.mxu0 0.0
  %231 = vmatpush.msra.mxu0 0.0
  %232 = vmatpush.msra.mxu0 0.0
  %233 = vmatpush.msra.mxu0 0.0
  %234 = vmatpush.msra.mxu0 0.0
  %235 = vmatpush.msra.mxu0 %v45
  %236 = vmatpush.msra.mxu0 %v26
  %237 = vmatpush.msra.mxu0 %v25
  %238 = vmatpush.msra.mxu0 %v24
  %239 = vmatpush.msra.mxu0 %v23
  %240 = vmatpush.msra.mxu0 %v22
  %241 = vmatpush.msra.mxu0 %v21
  %242 = vmatmul.f32.gmra.mxu0 %v224
  %v243 = vpop.f32.mrf.mxu0
  %v244 = vadd.f32 0.0, %v243
  %245 = vdwg.mxu0
  %v246 = vmax.f32 %v216, %v244
  %247 = vset.pattern.permute.xlu0 7
  %248 = vperm.xlu0 %247, %v32
  %v249 = vpop.permute.xlu0 %248
  %vm250 = vcmp.eq.s32.totalorder %v249, %v29
  %v251 = vsel %vm250, 1, 0
  %v252 = vcvt.s32.f32 %v251
  %v254 = vsel %vm39, %v252, 0
  %256 = vmatpush.msra.mxu0 0.0
  %257 = vmatpush.msra.mxu0 0.0
  %258 = vmatpush.msra.mxu0 0.0
  %259 = vmatpush.msra.mxu0 0.0
  %260 = vmatpush.msra.mxu0 0.0
  %261 = vmatpush.msra.mxu0 0.0
  %262 = vmatpush.msra.mxu0 0.0
  %263 = vmatpush.msra.mxu0 0.0
  %264 = vmatpush.msra.mxu0 0.0
  %265 = vmatpush.msra.mxu0 %v45
  %266 = vmatpush.msra.mxu0 %v26
  %267 = vmatpush.msra.mxu0 %v25
  %268 = vmatpush.msra.mxu0 %v24
  %269 = vmatpush.msra.mxu0 %v23
  %270 = vmatpush.msra.mxu0 %v22
  %271 = vmatpush.msra.mxu0 %v21
  %272 = vmatmul.f32.gmra.mxu0 %v254
  %v273 = vpop.f32.mrf.mxu0
  %v274 = vadd.f32 0.0, %v273
  %275 = vdwg.mxu0
  %v276 = vmax.f32 %v246, %v274
  %v277 = vperm.slane %v30, 0
  %v278 = vmul.f32 %v276, %v277
  %vm279 = vcmask 261120
  %v280 = vsel %vm279, %v278, 0.0
  %281 = vadd.xlane.f32.xlu0 %v280
  %v282 = vpop.xlane.xlu0 %281
  %v283 = vld [vmem:[%s1] sm:$0xff]
  %284 = vset.pattern.permute.xlu0 0
  %285 = vperm.xlu0 %284, %v283
  %v286 = vpop.permute.xlu0 %285
  %vm287 = vcmp.eq.s32.totalorder %v286, %v29
  %v288 = vsel %vm287, 1, 0
  %v289 = vcvt.s32.f32 %v288
  %v291 = vsel %vm39, %v289, 0
  %293 = vmatpush.msra.mxu0 0.0
  %294 = vmatpush.msra.mxu0 0.0
  %295 = vmatpush.msra.mxu0 0.0
  %296 = vmatpush.msra.mxu0 0.0
  %297 = vmatpush.msra.mxu0 0.0
  %298 = vmatpush.msra.mxu0 0.0
  %299 = vmatpush.msra.mxu0 0.0
  %300 = vmatpush.msra.mxu0 0.0
  %301 = vmatpush.msra.mxu0 0.0
  %302 = vmatpush.msra.mxu0 %v45
  %303 = vmatpush.msra.mxu0 %v26
  %304 = vmatpush.msra.mxu0 %v25
  %305 = vmatpush.msra.mxu0 %v24
  %306 = vmatpush.msra.mxu0 %v23
  %307 = vmatpush.msra.mxu0 %v22
  %308 = vmatpush.msra.mxu0 %v21
  %309 = vmatmul.f32.gmra.mxu0 %v291
  %v310 = vpop.f32.mrf.mxu0
  %v311 = vadd.f32 0.0, %v310
  %312 = vdwg.mxu0
  %313 = vset.pattern.permute.xlu0 1
  %314 = vperm.xlu0 %313, %v283
  %v315 = vpop.permute.xlu0 %314
  %vm316 = vcmp.eq.s32.totalorder %v315, %v29
  %v317 = vsel %vm316, 1, 0
  %v318 = vcvt.s32.f32 %v317
  %v320 = vsel %vm39, %v318, 0
  %322 = vmatpush.msra.mxu0 0.0
  %323 = vmatpush.msra.mxu0 0.0
  %324 = vmatpush.msra.mxu0 0.0
  %325 = vmatpush.msra.mxu0 0.0
  %326 = vmatpush.msra.mxu0 0.0
  %327 = vmatpush.msra.mxu0 0.0
  %328 = vmatpush.msra.mxu0 0.0
  %329 = vmatpush.msra.mxu0 0.0
  %330 = vmatpush.msra.mxu0 0.0
  %331 = vmatpush.msra.mxu0 %v45
  %332 = vmatpush.msra.mxu0 %v26
  %333 = vmatpush.msra.mxu0 %v25
  %334 = vmatpush.msra.mxu0 %v24
  %335 = vmatpush.msra.mxu0 %v23
  %336 = vmatpush.msra.mxu0 %v22
  %337 = vmatpush.msra.mxu0 %v21
  %338 = vmatmul.f32.gmra.mxu0 %v320
  %v339 = vpop.f32.mrf.mxu0
  %v340 = vadd.f32 0.0, %v339
  %341 = vdwg.mxu0
  %v342 = vmax.f32 %v311, %v340
  %343 = vset.pattern.permute.xlu0 2
  %344 = vperm.xlu0 %343, %v283
  %v345 = vpop.permute.xlu0 %344
  %vm346 = vcmp.eq.s32.totalorder %v345, %v29
  %v347 = vsel %vm346, 1, 0
  %v348 = vcvt.s32.f32 %v347
  %v350 = vsel %vm39, %v348, 0
  %352 = vmatpush.msra.mxu0 0.0
  %353 = vmatpush.msra.mxu0 0.0
  %354 = vmatpush.msra.mxu0 0.0
  %355 = vmatpush.msra.mxu0 0.0
  %356 = vmatpush.msra.mxu0 0.0
  %357 = vmatpush.msra.mxu0 0.0
  %358 = vmatpush.msra.mxu0 0.0
  %359 = vmatpush.msra.mxu0 0.0
  %360 = vmatpush.msra.mxu0 0.0
  %361 = vmatpush.msra.mxu0 %v45
  %362 = vmatpush.msra.mxu0 %v26
  %363 = vmatpush.msra.mxu0 %v25
  %364 = vmatpush.msra.mxu0 %v24
  %365 = vmatpush.msra.mxu0 %v23
  %366 = vmatpush.msra.mxu0 %v22
  %367 = vmatpush.msra.mxu0 %v21
  %368 = vmatmul.f32.gmra.mxu0 %v350
  %v369 = vpop.f32.mrf.mxu0
  %v370 = vadd.f32 0.0, %v369
  %371 = vdwg.mxu0
  %v372 = vmax.f32 %v342, %v370
  %373 = vset.pattern.permute.xlu0 3
  %374 = vperm.xlu0 %373, %v283
  %v375 = vpop.permute.xlu0 %374
  %vm376 = vcmp.eq.s32.totalorder %v375, %v29
  %v377 = vsel %vm376, 1, 0
  %v378 = vcvt.s32.f32 %v377
  %v380 = vsel %vm39, %v378, 0
  %382 = vmatpush.msra.mxu0 0.0
  %383 = vmatpush.msra.mxu0 0.0
  %384 = vmatpush.msra.mxu0 0.0
  %385 = vmatpush.msra.mxu0 0.0
  %386 = vmatpush.msra.mxu0 0.0
  %387 = vmatpush.msra.mxu0 0.0
  %388 = vmatpush.msra.mxu0 0.0
  %389 = vmatpush.msra.mxu0 0.0
  %390 = vmatpush.msra.mxu0 0.0
  %391 = vmatpush.msra.mxu0 %v45
  %392 = vmatpush.msra.mxu0 %v26
  %393 = vmatpush.msra.mxu0 %v25
  %394 = vmatpush.msra.mxu0 %v24
  %395 = vmatpush.msra.mxu0 %v23
  %396 = vmatpush.msra.mxu0 %v22
  %397 = vmatpush.msra.mxu0 %v21
  %398 = vmatmul.f32.gmra.mxu0 %v380
  %v399 = vpop.f32.mrf.mxu0
  %v400 = vadd.f32 0.0, %v399
  %401 = vdwg.mxu0
  %v402 = vmax.f32 %v372, %v400
  %403 = vset.pattern.permute.xlu0 4
  %404 = vperm.xlu0 %403, %v283
  %v405 = vpop.permute.xlu0 %404
  %vm406 = vcmp.eq.s32.totalorder %v405, %v29
  %v407 = vsel %vm406, 1, 0
  %v408 = vcvt.s32.f32 %v407
  %v410 = vsel %vm39, %v408, 0
  %412 = vmatpush.msra.mxu0 0.0
  %413 = vmatpush.msra.mxu0 0.0
  %414 = vmatpush.msra.mxu0 0.0
  %415 = vmatpush.msra.mxu0 0.0
  %416 = vmatpush.msra.mxu0 0.0
  %417 = vmatpush.msra.mxu0 0.0
  %418 = vmatpush.msra.mxu0 0.0
  %419 = vmatpush.msra.mxu0 0.0
  %420 = vmatpush.msra.mxu0 0.0
  %421 = vmatpush.msra.mxu0 %v45
  %422 = vmatpush.msra.mxu0 %v26
  %423 = vmatpush.msra.mxu0 %v25
  %424 = vmatpush.msra.mxu0 %v24
  %425 = vmatpush.msra.mxu0 %v23
  %426 = vmatpush.msra.mxu0 %v22
  %427 = vmatpush.msra.mxu0 %v21
  %428 = vmatmul.f32.gmra.mxu0 %v410
  %v429 = vpop.f32.mrf.mxu0
  %v430 = vadd.f32 0.0, %v429
  %431 = vdwg.mxu0
  %v432 = vmax.f32 %v402, %v430
  %433 = vset.pattern.permute.xlu0 5
  %434 = vperm.xlu0 %433, %v283
  %v435 = vpop.permute.xlu0 %434
  %vm436 = vcmp.eq.s32.totalorder %v435, %v29
  %v437 = vsel %vm436, 1, 0
  %v438 = vcvt.s32.f32 %v437
  %v440 = vsel %vm39, %v438, 0
  %442 = vmatpush.msra.mxu0 0.0
  %443 = vmatpush.msra.mxu0 0.0
  %444 = vmatpush.msra.mxu0 0.0
  %445 = vmatpush.msra.mxu0 0.0
  %446 = vmatpush.msra.mxu0 0.0
  %447 = vmatpush.msra.mxu0 0.0
  %448 = vmatpush.msra.mxu0 0.0
  %449 = vmatpush.msra.mxu0 0.0
  %450 = vmatpush.msra.mxu0 0.0
  %451 = vmatpush.msra.mxu0 %v45
  %452 = vmatpush.msra.mxu0 %v26
  %453 = vmatpush.msra.mxu0 %v25
  %454 = vmatpush.msra.mxu0 %v24
  %455 = vmatpush.msra.mxu0 %v23
  %456 = vmatpush.msra.mxu0 %v22
  %457 = vmatpush.msra.mxu0 %v21
  %458 = vmatmul.f32.gmra.mxu0 %v440
  %v459 = vpop.f32.mrf.mxu0
  %v460 = vadd.f32 0.0, %v459
  %461 = vdwg.mxu0
  %v462 = vmax.f32 %v432, %v460
  %463 = vset.pattern.permute.xlu0 6
  %464 = vperm.xlu0 %463, %v283
  %v465 = vpop.permute.xlu0 %464
  %vm466 = vcmp.eq.s32.totalorder %v465, %v29
  %v467 = vsel %vm466, 1, 0
  %v468 = vcvt.s32.f32 %v467
  %v470 = vsel %vm39, %v468, 0
  %472 = vmatpush.msra.mxu0 0.0
  %473 = vmatpush.msra.mxu0 0.0
  %474 = vmatpush.msra.mxu0 0.0
  %475 = vmatpush.msra.mxu0 0.0
  %476 = vmatpush.msra.mxu0 0.0
  %477 = vmatpush.msra.mxu0 0.0
  %478 = vmatpush.msra.mxu0 0.0
  %479 = vmatpush.msra.mxu0 0.0
  %480 = vmatpush.msra.mxu0 0.0
  %481 = vmatpush.msra.mxu0 %v45
  %482 = vmatpush.msra.mxu0 %v26
  %483 = vmatpush.msra.mxu0 %v25
  %484 = vmatpush.msra.mxu0 %v24
  %485 = vmatpush.msra.mxu0 %v23
  %486 = vmatpush.msra.mxu0 %v22
  %487 = vmatpush.msra.mxu0 %v21
  %488 = vmatmul.f32.gmra.mxu0 %v470
  %v489 = vpop.f32.mrf.mxu0
  %v490 = vadd.f32 0.0, %v489
  %491 = vdwg.mxu0
  %v492 = vmax.f32 %v462, %v490
  %493 = vset.pattern.permute.xlu0 7
  %494 = vperm.xlu0 %493, %v283
  %v495 = vpop.permute.xlu0 %494
  %vm496 = vcmp.eq.s32.totalorder %v495, %v29
  %v497 = vsel %vm496, 1, 0
  %v498 = vcvt.s32.f32 %v497
  %v500 = vsel %vm39, %v498, 0
  %502 = vmatpush.msra.mxu0 0.0
  %503 = vmatpush.msra.mxu0 0.0
  %504 = vmatpush.msra.mxu0 0.0
  %505 = vmatpush.msra.mxu0 0.0
  %506 = vmatpush.msra.mxu0 0.0
  %507 = vmatpush.msra.mxu0 0.0
  %508 = vmatpush.msra.mxu0 0.0
  %509 = vmatpush.msra.mxu0 0.0
  %510 = vmatpush.msra.mxu0 0.0
  %511 = vmatpush.msra.mxu0 %v45
  %512 = vmatpush.msra.mxu0 %v26
  %513 = vmatpush.msra.mxu0 %v25
  %514 = vmatpush.msra.mxu0 %v24
  %515 = vmatpush.msra.mxu0 %v23
  %516 = vmatpush.msra.mxu0 %v22
  %517 = vmatpush.msra.mxu0 %v21
  %518 = vmatmul.f32.gmra.mxu0 %v500
  %v519 = vpop.f32.mrf.mxu0
  %v520 = vadd.f32 0.0, %v519
  %521 = vdwg.mxu0
  %v522 = vmax.f32 %v492, %v520
  %v523 = vperm.slane %v31, 0
  %v524 = vmul.f32 %v522, %v523
  %v525 = vsel %vm279, %v524, 0.0
  %526 = vadd.xlane.f32.xlu0 %v525
  %v527 = vpop.xlane.xlu0 %526
  %v528 = vadd.f32 %v282, %v527
  %s529 = sld [smem:[#allocation2]]
  %v530 = vstv %s529
  %v531 = vadd.f32 %v528, %v530
  %v532 = vxor.u32 %v531, 2147483648
  %v533 = vmul.f32 %v532, 1.442695
  %v534 = vpow.pop %v533
  %v535 = vadd.f32 %v534, 1.0
  %v536 = vrcp.pop %v535
  %v537 = vmul.f32 %v535, %v536
  %v538 = vsub.f32 1.0, %v537
  %v539 = vmul.f32 %v536, %v538
  %v540 = vadd.f32 %v536, %v539
  %vm541 = vweird.f32 %v535
  %vm542 = vweird.f32 %v536
  %vm543 = vmor %vm541, %vm542
  %v544 = vsel %vm543, %v536, %v540
  %v545 = vand.u32 2147483647, %v535
  %vm546 = vcmp.eq.f32.partialorder %v545, 8.507059e+37
  %v547 = vand.u32 %v535, 2147483648
  %v548 = vor.u32 1.1754944e-38, %v547
  %v549 = vsel %vm546, %v548, %v544
  %v550 = vmul.f32 1.0, %v549
  %vm551 = vcmask 7168
  %552 = vst.msk [vmem:[%s5] sm:$0xff] %vm551, %v550
  // Predicated region
  $region22: #{tpu_custom_call.1} parent=0 // pred_check
    _
  $region23: #{tpu_custom_call.1} parent=0 // pred_check_branch
    %554 = sbr.rel (0) target = $region25
  $region24: #{tpu_custom_call.1} parent=0 // pred_region
    _
  $region25: #{tpu_custom_call.1} parent=0 // pred_fallthru
    _
  // Predicated region
  $region26: #{tpu_custom_call.1} parent=0 // pred_check
    _
  $region27: #{tpu_custom_call.1} parent=0 // pred_check_branch
    %556 = sbr.rel (0) target = $region29
  $region28: #{tpu_custom_call.1} parent=0 // pred_region
    _
  $region29: #{tpu_custom_call.1} parent=0 // pred_fallthru
    _

</llo_original>
